<compile_context>
chip_gen: v5e
topology: v5e:2x2
jax: 0.10.0
libtpu: 0.0.40
codegen_flags: <defaults>
</compile_context>

<pallas_src>
import functools

import jax
import jax.numpy as jnp
from jax.experimental import pallas as pl
from jax.experimental.pallas import tpu as pltpu


def _round_up(x, m):
    return (x + m - 1) // m * m


def _vmem_capacity_bytes():
    try:
        return int(pltpu.get_tpu_info().vmem_capacity_bytes)
    except Exception:
        return 64 * 1024 * 1024  # conservative fallback (v7x per-core VMEM)


def _single_buffered_spec(block_shape, index_map):
    """Resident operand: constant index_map never re-DMAs, so one buffer suffices."""
    buffered = getattr(pl, "Buffered", None)
    if buffered is not None:
        try:
            return pl.BlockSpec(block_shape, index_map, pipeline_mode=buffered(1))
        except TypeError:
            pass
    return pl.BlockSpec(block_shape, index_map)


def _layernorm(y, gamma, beta, mask, d_real, d_pad):
    # y: (tm, d_pad) f32. Padded lanes of y are exactly 0 (zero-padded W/b), so the
    # sums over d_pad equal the sums over d_real; padded lanes of `centered` are
    # -mean and must be masked before the variance.
    inv_d = 1.0 / d_real
    mean = jnp.sum(y, axis=-1, keepdims=True) * inv_d
    centered = y - mean
    if d_real != d_pad:
        centered = centered * mask  # resident {1,0} mask, no per-step iota
    var = jnp.sum(centered * centered, axis=-1, keepdims=True) * inv_d
    return centered * jax.lax.rsqrt(var + 1e-5) * gamma + beta


def _resident_kernel(x_ref, w1_ref, b1_ref, w2_ref, b2_ref, gamma_ref, beta_ref,
                     mask_ref, o_ref, *, d_real, d_pad, compute_dtype):
    x = x_ref[...].astype(compute_dtype)          # in-kernel cast (no wrapper pass)
    h = jnp.dot(x, w1_ref[...], preferred_element_type=jnp.float32)
    h = jnp.maximum(h + b1_ref[...], 0.0).astype(compute_dtype)
    y = jnp.dot(h, w2_ref[...], preferred_element_type=jnp.float32) + b2_ref[...]
    o_ref[...] = _layernorm(y, gamma_ref[...], beta_ref[...], mask_ref[...],
                            d_real, d_pad).astype(o_ref.dtype)


def _ksplit_kernel(x_ref, w1_ref, b1_ref, w2_ref, b2_ref, gamma_ref, beta_ref,
                   mask_ref, o_ref, acc_ref, *, d_real, d_pad, compute_dtype):
    k = pl.program_id(1)

    x = x_ref[...].astype(compute_dtype)
    h = jnp.dot(x, w1_ref[...], preferred_element_type=jnp.float32)
    h = jnp.maximum(h + b1_ref[...], 0.0).astype(compute_dtype)
    part = jnp.dot(h, w2_ref[...], preferred_element_type=jnp.float32)

    @pl.when(k == 0)
    def _():
        acc_ref[...] = part

    @pl.when(k != 0)
    def _():
        acc_ref[...] += part

    @pl.when(k == pl.num_programs(1) - 1)
    def _():
        y = acc_ref[...] + b2_ref[...]
        o_ref[...] = _layernorm(y, gamma_ref[...], beta_ref[...], mask_ref[...],
                                d_real, d_pad).astype(o_ref.dtype)


@functools.partial(jax.jit, static_argnames=("row_tile", "compute_dtype", "k_tile"))
def token_encoder(token_embeddings, w1, b1, w2, b2, gamma, beta,
                  row_tile=256, compute_dtype=jnp.bfloat16, k_tile=None):
    """Forward pass of TokenEncoder: LayerNorm(Linear(ReLU(Linear(x))))."""
    *lead, d = token_embeddings.shape
    x2d = token_embeddings.reshape(-1, d)
    n = x2d.shape[0]
    out_dtype = token_embeddings.dtype

    cd = jnp.dtype(compute_dtype)
    cd_bytes = cd.itemsize
    out_bytes = jnp.dtype(out_dtype).itemsize

    d_pad = _round_up(d, 128)  # lane-dense last dim

    # ---- Row-tile selection: MXU-aligned, >= 2 grid steps when possible (v7x megacore).
    align = 256 if row_tile >= 256 else 128       # 128 for small/v5e row_tile requests
    tm_target = _round_up(row_tile, align)
    n_sub = _round_up(max(n, 1), 16)              # bf16 sublane packing
    if n_sub <= tm_target:
        tm = n_sub
        if n_sub >= 2 * 128:                      # enough rows -> split across 2 TCs
            tm = _round_up(-(-n_sub // 2), 128)
    else:
        tm = tm_target
    n_pad = _round_up(n_sub, tm)
    num_row_tiles = n_pad // tm

    # ---- VMEM budget from hardware (leave headroom for Mosaic internal scratch).
    vmem_cap = _vmem_capacity_bytes()
    vmem_budget = int(0.85 * vmem_cap)
    vmem_cap_limit = int(0.87 * vmem_cap)

    resident_bytes = (
        2 * d_pad * d_pad * cd_bytes              # W1, W2 (single-buffered)
        + 2 * tm * d_pad * 4                      # x tile (double-buffered, <= f32)
        + 2 * tm * d_pad * out_bytes              # out tile (double-buffered)
        + 5 * 8 * d_pad * 4                       # b1/b2/gamma/beta/mask (sublane pad)
        + 4 * tm * d_pad * 4                      # f32 intermediates (h, y, stats)
    )
    use_ksplit = (k_tile is not None) or (resident_bytes > vmem_budget)

    # ---- Pad / cast inputs only when genuinely needed (avoid extra HBM passes).
    needs_pad = (d_pad != d) or (n_pad != n)
    if needs_pad:
        x_in = jnp.pad(x2d.astype(compute_dtype), ((0, n_pad - n), (0, d_pad - d)))
    else:
        x_in = x2d                                # cast happens inside the kernel

    def _mat(w):
        w = w.astype(compute_dtype)
        if d_pad != d:
            w = jnp.pad(w, ((0, d_pad - d), (0, d_pad - d)))
        return w

    def _vec(v):
        v = v.astype(jnp.float32)
        if d_pad != d:
            v = jnp.pad(v, (0, d_pad - d))
        return v.reshape(1, d_pad)

    w1_p, w2_p = _mat(w1), _mat(w2)
    b1_p, b2_p, g_p, bt_p = _vec(b1), _vec(b2), _vec(gamma), _vec(beta)
    mask_p = (jnp.arange(d_pad) < d).astype(jnp.float32).reshape(1, d_pad)

    cost = pl.CostEstimate(
        flops=4 * n_pad * d_pad * d_pad + 10 * n_pad * d_pad,
        transcendentals=n_pad,                    # one rsqrt per row
        bytes_accessed=(n_pad * d_pad * (4 + out_bytes)
                        + 2 * d_pad * d_pad * cd_bytes + 5 * d_pad * 4),
    )

    if not use_ksplit:
        # ---------------- resident-weight path ----------------
        kernel = functools.partial(_resident_kernel, d_real=d, d_pad=d_pad,
                                   compute_dtype=compute_dtype)
        w_spec = _single_buffered_spec((d_pad, d_pad), lambda i: (0, 0))
        v_spec = _single_buffered_spec((1, d_pad), lambda i: (0, 0))
        grid = (num_row_tiles,)
        in_specs = [
            pl.BlockSpec((tm, d_pad), lambda i: (i, 0)),      # x row tile
            w_spec, v_spec,                                   # W1, b1
            w_spec, v_spec,                                   # W2, b2
            v_spec, v_spec, v_spec,                           # gamma, beta, mask
        ]
        out_specs = pl.BlockSpec((tm, d_pad), lambda i: (i, 0))
        scratch_shapes = []
        dim_sem = ("parallel",)
        vmem_est = resident_bytes
    else:
        # ---------------- hidden-dim K-split path (large emb_dim / v7x) ----------------
        fixed = (2 * tm * d_pad * 4 + 2 * tm * d_pad * out_bytes
                 + tm * d_pad * 4                 # accumulator scratch
                 + 4 * tm * d_pad * 4             # f32 intermediates
                 + 5 * 8 * d_pad * 4)             # resident vectors
        if k_tile is not None:
            kt = min(_round_up(k_tile, 128), d_pad)
            while d_pad % kt != 0:
                kt -= 128
        else:
            kt = d_pad
            while kt > 128 and (d_pad % kt != 0 or
                                fixed + 4 * kt * d_pad * cd_bytes > vmem_budget):
                kt -= 128
        kt = max(kt, 128)
        num_k = d_pad // kt

        kernel = functools.partial(_ksplit_kernel, d_real=d, d_pad=d_pad,
                                   compute_dtype=compute_dtype)
        v_spec = _single_buffered_spec((1, d_pad), lambda i, k: (0, 0))
        grid = (num_row_tiles, num_k)
        in_specs = [
            pl.BlockSpec((tm, d_pad), lambda i, k: (i, 0)),   # x (resident across k)
            pl.BlockSpec((d_pad, kt), lambda i, k: (0, k)),   # W1 column block
            pl.BlockSpec((1, kt), lambda i, k: (0, k)),       # b1 chunk
            pl.BlockSpec((kt, d_pad), lambda i, k: (k, 0)),   # W2 row block
            v_spec, v_spec, v_spec, v_spec,                   # b2, gamma, beta, mask
        ]
        out_specs = pl.BlockSpec((tm, d_pad), lambda i, k: (i, 0))
        scratch_shapes = [pltpu.VMEM((tm, d_pad), jnp.float32)]
        dim_sem = ("parallel", "arbitrary")
        vmem_est = fixed + 4 * kt * d_pad * cd_bytes + 2 * 8 * kt * 4

    vmem_limit = int(min(max(1.2 * vmem_est, 16 * 1024 * 1024), vmem_cap_limit))

    out = pl.pallas_call(
        kernel,
        out_shape=jax.ShapeDtypeStruct((n_pad, d_pad), out_dtype),
        grid_spec=pltpu.PrefetchScalarGridSpec(
            num_scalar_prefetch=0,
            grid=grid,
            in_specs=in_specs,
            out_specs=out_specs,
            scratch_shapes=scratch_shapes),
        compiler_params=pltpu.CompilerParams(
            dimension_semantics=dim_sem,
            vmem_limit_bytes=vmem_limit),
        cost_estimate=cost,
    )(x_in, w1_p, b1_p, w2_p, b2_p, g_p, bt_p, mask_p)

    if needs_pad:
        out = out[:n, :d]
    return out.reshape(*lead, d)


def init_token_encoder_params(key, emb_dim, dtype=jnp.float32):
    # Deterministic synthetic init (PyTorch-Linear-like uniform fan-in scaling).
    k1, k2, k3, k4 = jax.random.split(key, 4)
    bound = 1.0 / (emb_dim ** 0.5)
    w1 = jax.random.uniform(k1, (emb_dim, emb_dim), dtype, -bound, bound)
    b1 = jax.random.uniform(k2, (emb_dim,), dtype, -bound, bound)
    w2 = jax.random.uniform(k3, (emb_dim, emb_dim), dtype, -bound, bound)
    b2 = jax.random.uniform(k4, (emb_dim,), dtype, -bound, bound)
    gamma = jnp.ones((emb_dim,), dtype)   # LayerNorm weight
    beta = jnp.zeros((emb_dim,), dtype)   # LayerNorm bias
    return w1, b1, w2, b2, gamma, beta


def _reference(x, w1, b1, w2, b2, gamma, beta):
    h = jnp.maximum(x @ w1 + b1, 0.0)
    y = h @ w2 + b2
    mean = jnp.mean(y, axis=-1, keepdims=True)
    var = jnp.mean((y - mean) ** 2, axis=-1, keepdims=True)
    return (y - mean) * jax.lax.rsqrt(var + 1e-5) * gamma + beta


if __name__ == "__main__":
    key = jax.random.PRNGKey(0)
    kx, kp, kx2, kp2 = jax.random.split(key, 4)

    # Case 1: default bf16 compute (resident weights, lane padding 32 -> 128).
    batch, seq, emb_dim = 2, 8, 32
    x = jax.random.normal(kx, (batch, seq, emb_dim), jnp.float32)
    params = init_token_encoder_params(kp, emb_dim)
    out = jax.block_until_ready(token_encoder(x, *params))
    ref = _reference(x, *params)
    assert out.shape == x.shape and out.dtype == x.dtype
    # bf16 matmul operands (f32 accumulation + f32 LayerNorm): loosened tolerance.
    assert jnp.allclose(out, ref, atol=3e-2, rtol=3e-2), "bf16 resident path mismatch"

    # Case 2: f32 compute with a forced hidden-dim K-split (2 k-steps), no padding.
    emb_dim2 = 256
    x2 = jax.random.normal(kx2, (batch, seq, emb_dim2), jnp.float32)
    params2 = init_token_encoder_params(kp2, emb_dim2)
    out2 = jax.block_until_ready(
        token_encoder(x2, *params2, compute_dtype=jnp.float32, k_tile=128))
    ref2 = _reference(x2, *params2)
    assert out2.shape == x2.shape and out2.dtype == x2.dtype
    # Tolerance leaves margin for possible reduced-precision f32 MXU passes.
    assert jnp.allclose(out2, ref2, atol=1e-2, rtol=1e-2), "f32 K-split path mismatch"

    print("KERNEL_OK")
</pallas_src>

<mosaic_0001>
module attributes {stable_mosaic.version = 11 : i64} {
  func.func @_resident_kernel(%arg0: i32, %arg1: memref<16x128xbf16, #tpu.memory_space<vmem>>, %arg2: memref<128x128xbf16, #tpu.memory_space<vmem>>, %arg3: memref<1x128xf32, #tpu.memory_space<vmem>>, %arg4: memref<128x128xbf16, #tpu.memory_space<vmem>>, %arg5: memref<1x128xf32, #tpu.memory_space<vmem>>, %arg6: memref<1x128xf32, #tpu.memory_space<vmem>>, %arg7: memref<1x128xf32, #tpu.memory_space<vmem>>, %arg8: memref<1x128xf32, #tpu.memory_space<vmem>>, %arg9: memref<16x128xf32, #tpu.memory_space<vmem>>) attributes {dimension_semantics = [#tpu.dimension_semantics<parallel>], iteration_bounds = array<i64: 1>, scalar_prefetch = 0 : i64, scratch_operands = 0 : i64, tpu.core_type = #tpu.core_type<tc>, window_params = [{transform_indices = @transform_0, window_bounds = array<i64: 16, 128>}, {pipeline_mode = #tpu.pipeline_mode<synchronous>, transform_indices = @transform_1, window_bounds = array<i64: 128, 128>}, {pipeline_mode = #tpu.pipeline_mode<synchronous>, transform_indices = @transform_2, window_bounds = array<i64: 1, 128>}, {pipeline_mode = #tpu.pipeline_mode<synchronous>, transform_indices = @transform_3, window_bounds = array<i64: 128, 128>}, {pipeline_mode = #tpu.pipeline_mode<synchronous>, transform_indices = @transform_4, window_bounds = array<i64: 1, 128>}, {pipeline_mode = #tpu.pipeline_mode<synchronous>, transform_indices = @transform_5, window_bounds = array<i64: 1, 128>}, {pipeline_mode = #tpu.pipeline_mode<synchronous>, transform_indices = @transform_6, window_bounds = array<i64: 1, 128>}, {pipeline_mode = #tpu.pipeline_mode<synchronous>, transform_indices = @transform_7, window_bounds = array<i64: 1, 128>}, {transform_indices = @transform_8, window_bounds = array<i64: 16, 128>}]} {
    %c0 = arith.constant 0 : index
    %c0_0 = arith.constant 0 : index
    %0 = vector.load %arg1[%c0, %c0_0] : memref<16x128xbf16, #tpu.memory_space<vmem>>, vector<16x128xbf16>
    %c0_1 = arith.constant 0 : index
    %c0_2 = arith.constant 0 : index
    %1 = vector.load %arg2[%c0_1, %c0_2] : memref<128x128xbf16, #tpu.memory_space<vmem>>, vector<128x128xbf16>
    %cst = arith.constant dense<0.000000e+00> : vector<16x128xf32>
    %2 = tpu.matmul %0, %1, %cst {dimension_numbers = #tpu.dot_dimension_numbers<[1], [0], [0], [1], [0, 0, 1, 1], [], []>} : vector<16x128xbf16>, vector<128x128xbf16>, vector<16x128xf32> -> vector<16x128xf32>
    %c0_3 = arith.constant 0 : index
    %c0_4 = arith.constant 0 : index
    %3 = vector.load %arg3[%c0_3, %c0_4] : memref<1x128xf32, #tpu.memory_space<vmem>>, vector<1x128xf32>
    %4 = vector.broadcast %3 : vector<1x128xf32> to vector<16x128xf32>
    %5 = arith.addf %2, %4 : vector<16x128xf32>
    %cst_5 = arith.constant 0.000000e+00 : f32
    %6 = vector.broadcast %cst_5 : f32 to vector<16x128xf32>
    %7 = arith.maximumf %5, %6 : vector<16x128xf32>
    %8 = arith.truncf %7 : vector<16x128xf32> to vector<16x128xbf16>
    %c0_6 = arith.constant 0 : index
    %c0_7 = arith.constant 0 : index
    %9 = vector.load %arg4[%c0_6, %c0_7] : memref<128x128xbf16, #tpu.memory_space<vmem>>, vector<128x128xbf16>
    %cst_8 = arith.constant dense<0.000000e+00> : vector<16x128xf32>
    %10 = tpu.matmul %8, %9, %cst_8 {dimension_numbers = #tpu.dot_dimension_numbers<[1], [0], [0], [1], [0, 0, 1, 1], [], []>} : vector<16x128xbf16>, vector<128x128xbf16>, vector<16x128xf32> -> vector<16x128xf32>
    %c0_9 = arith.constant 0 : index
    %c0_10 = arith.constant 0 : index
    %11 = vector.load %arg5[%c0_9, %c0_10] : memref<1x128xf32, #tpu.memory_space<vmem>>, vector<1x128xf32>
    %12 = vector.broadcast %11 : vector<1x128xf32> to vector<16x128xf32>
    %13 = arith.addf %10, %12 : vector<16x128xf32>
    %c0_11 = arith.constant 0 : index
    %c0_12 = arith.constant 0 : index
    %14 = vector.load %arg6[%c0_11, %c0_12] : memref<1x128xf32, #tpu.memory_space<vmem>>, vector<1x128xf32>
    %c0_13 = arith.constant 0 : index
    %c0_14 = arith.constant 0 : index
    %15 = vector.load %arg7[%c0_13, %c0_14] : memref<1x128xf32, #tpu.memory_space<vmem>>, vector<1x128xf32>
    %c0_15 = arith.constant 0 : index
    %c0_16 = arith.constant 0 : index
    %16 = vector.load %arg8[%c0_15, %c0_16] : memref<1x128xf32, #tpu.memory_space<vmem>>, vector<1x128xf32>
    %cst_17 = arith.constant dense<0.000000e+00> : vector<16xf32>
    %17 = vector.multi_reduction <add>, %13, %cst_17 [1] : vector<16x128xf32> to vector<16xf32>
    %18 = vector.shape_cast %17 : vector<16xf32> to vector<16x1xf32>
    %cst_18 = arith.constant 3.125000e-02 : f32
    %19 = vector.broadcast %cst_18 : f32 to vector<16x1xf32>
    %20 = arith.mulf %18, %19 : vector<16x1xf32>
    %21 = vector.broadcast %20 : vector<16x1xf32> to vector<16x128xf32>
    %22 = arith.subf %13, %21 : vector<16x128xf32>
    %23 = vector.broadcast %16 : vector<1x128xf32> to vector<16x128xf32>
    %24 = arith.mulf %22, %23 : vector<16x128xf32>
    %25 = arith.mulf %24, %24 : vector<16x128xf32>
    %cst_19 = arith.constant dense<0.000000e+00> : vector<16xf32>
    %26 = vector.multi_reduction <add>, %25, %cst_19 [1] : vector<16x128xf32> to vector<16xf32>
    %27 = vector.shape_cast %26 : vector<16xf32> to vector<16x1xf32>
    %cst_20 = arith.constant 3.125000e-02 : f32
    %28 = vector.broadcast %cst_20 : f32 to vector<16x1xf32>
    %29 = arith.mulf %27, %28 : vector<16x1xf32>
    %cst_21 = arith.constant 9.99999974E-6 : f32
    %30 = vector.broadcast %cst_21 : f32 to vector<16x1xf32>
    %31 = arith.addf %29, %30 : vector<16x1xf32>
    %32 = math.rsqrt %31 : vector<16x1xf32>
    %33 = vector.broadcast %32 : vector<16x1xf32> to vector<16x128xf32>
    %34 = arith.mulf %24, %33 : vector<16x128xf32>
    %35 = vector.broadcast %14 : vector<1x128xf32> to vector<16x128xf32>
    %36 = arith.mulf %34, %35 : vector<16x128xf32>
    %37 = vector.broadcast %15 : vector<1x128xf32> to vector<16x128xf32>
    %38 = arith.addf %36, %37 : vector<16x128xf32>
    %c0_22 = arith.constant 0 : index
    %c0_23 = arith.constant 0 : index
    %39 = vector.load %arg9[%c0_22, %c0_23] : memref<16x128xf32, #tpu.memory_space<vmem>>, vector<16x128xf32>
    tpu.vector_store %arg9[%c0_22, %c0_23], %38 {strides = array<i32>} : memref<16x128xf32, #tpu.memory_space<vmem>>, vector<16x128xf32>,
    return
  }
  func.func @transform_0(%arg0: i32) -> (i32, i32) {
    %c0_i32 = arith.constant 0 : i32
    %c0_i32_0 = arith.constant 0 : i32
    return %arg0, %c0_i32 : i32, i32
  }
  func.func @transform_1(%arg0: i32) -> (i32, i32) {
    %c0_i32 = arith.constant 0 : i32
    %c0_i32_0 = arith.constant 0 : i32
    %c0_i32_1 = arith.constant 0 : i32
    return %c0_i32, %c0_i32_0 : i32, i32
  }
  func.func @transform_2(%arg0: i32) -> (i32, i32) {
    %c0_i32 = arith.constant 0 : i32
    %c0_i32_0 = arith.constant 0 : i32
    %c0_i32_1 = arith.constant 0 : i32
    return %c0_i32, %c0_i32_0 : i32, i32
  }
  func.func @transform_3(%arg0: i32) -> (i32, i32) {
    %c0_i32 = arith.constant 0 : i32
    %c0_i32_0 = arith.constant 0 : i32
    %c0_i32_1 = arith.constant 0 : i32
    return %c0_i32, %c0_i32_0 : i32, i32
  }
  func.func @transform_4(%arg0: i32) -> (i32, i32) {
    %c0_i32 = arith.constant 0 : i32
    %c0_i32_0 = arith.constant 0 : i32
    %c0_i32_1 = arith.constant 0 : i32
    return %c0_i32, %c0_i32_0 : i32, i32
  }
  func.func @transform_5(%arg0: i32) -> (i32, i32) {
    %c0_i32 = arith.constant 0 : i32
    %c0_i32_0 = arith.constant 0 : i32
    %c0_i32_1 = arith.constant 0 : i32
    return %c0_i32, %c0_i32_0 : i32, i32
  }
  func.func @transform_6(%arg0: i32) -> (i32, i32) {
    %c0_i32 = arith.constant 0 : i32
    %c0_i32_0 = arith.constant 0 : i32
    %c0_i32_1 = arith.constant 0 : i32
    return %c0_i32, %c0_i32_0 : i32, i32
  }
  func.func @transform_7(%arg0: i32) -> (i32, i32) {
    %c0_i32 = arith.constant 0 : i32
    %c0_i32_0 = arith.constant 0 : i32
    %c0_i32_1 = arith.constant 0 : i32
    return %c0_i32, %c0_i32_0 : i32, i32
  }
  func.func @transform_8(%arg0: i32) -> (i32, i32) {
    %c0_i32 = arith.constant 0 : i32
    %c0_i32_0 = arith.constant 0 : i32
    return %arg0, %c0_i32 : i32, i32
  }
}

</mosaic_0001>

<llo_original>
// kernel: token_encoder.1
$region0: #{token_encoder.1}
  #allocation0 [shape = 'u32[]', space=smem, size = 0x4, offset = 0x4, fixed_abs, tag = 'smem constant byte address 0x4 - core index']
  #allocation1 [shape = 'u32[72,128]{1,0:T(1,128)}', space=vmem, size = 0x9000, scoped, tag = 'internal scratch']
  %s0 = inlined_call_operand.vmem [shape: bf16[16,128], index: 0, kind: input, shape index: {}]
  %s1 = inlined_call_operand.vmem [shape: bf16[128,128], index: 1, kind: input, shape index: {}]
  %s2 = inlined_call_operand.vmem [shape: f32[1,128], index: 2, kind: input, shape index: {}]
  %s3 = inlined_call_operand.vmem [shape: bf16[128,128], index: 3, kind: input, shape index: {}]
  %s4 = inlined_call_operand.vmem [shape: f32[1,128], index: 4, kind: input, shape index: {}]
  %s5 = inlined_call_operand.vmem [shape: f32[1,128], index: 5, kind: input, shape index: {}]
  %s6 = inlined_call_operand.vmem [shape: f32[1,128], index: 6, kind: input, shape index: {}]
  %s7 = inlined_call_operand.vmem [shape: f32[1,128], index: 7, kind: input, shape index: {}]
  %s8 = inlined_call_operand.vmem [shape: f32[16,128], index: 8, kind: output, shape index: {}]
  %s9 = sld [smem:[#allocation0]]
  $region42: #{token_encoder.1} parent=0
    _
  %s11 = ssub.s32 1, %s9
  %s12 = scalar_select 0, %s11, %s9
  // Predicated region
  $region2: #{token_encoder.1} parent=0 // pred_check
    _
  $region3: #{token_encoder.1} parent=0 // pred_check_branch
    %14 = sbr.rel (0) target = $region5
  $region4: #{token_encoder.1} parent=0 // pred_region
    _
  $region5: #{token_encoder.1} parent=0 // pred_fallthru
    _
  // Predicated region
  $region6: #{token_encoder.1} parent=0 // pred_check
    _
  $region7: #{token_encoder.1} parent=0 // pred_check_branch
    %16 = sbr.rel (0) target = $region9
  $region8: #{token_encoder.1} parent=0 // pred_region
    _
  $region9: #{token_encoder.1} parent=0 // pred_fallthru
    _
  // Predicated region
  $region10: #{token_encoder.1} parent=0 // pred_check
    _
  $region11: #{token_encoder.1} parent=0 // pred_check_branch
    %18 = sbr.rel (0) target = $region13
  $region12: #{token_encoder.1} parent=0 // pred_region
    _
  $region13: #{token_encoder.1} parent=0 // pred_fallthru
    _
  // Predicated region
  $region14: #{token_encoder.1} parent=0 // pred_check
    _
  $region15: #{token_encoder.1} parent=0 // pred_check_branch
    %20 = sbr.rel (0) target = $region17
  $region16: #{token_encoder.1} parent=0 // pred_region
    _
  $region17: #{token_encoder.1} parent=0 // pred_fallthru
    _
  // Predicated region
  $region18: #{token_encoder.1} parent=0 // pred_check
    _
  $region19: #{token_encoder.1} parent=0 // pred_check_branch
    %22 = sbr.rel (0) target = $region21
  $region20: #{token_encoder.1} parent=0 // pred_region
    _
  $region21: #{token_encoder.1} parent=0 // pred_fallthru
    _
  // Predicated region
  $region22: #{token_encoder.1} parent=0 // pred_check
    _
  $region23: #{token_encoder.1} parent=0 // pred_check_branch
    %24 = sbr.rel (0) target = $region25
  $region24: #{token_encoder.1} parent=0 // pred_region
    _
  $region25: #{token_encoder.1} parent=0 // pred_fallthru
    _
  // Predicated region
  $region26: #{token_encoder.1} parent=0 // pred_check
    _
  $region27: #{token_encoder.1} parent=0 // pred_check_branch
    %26 = sbr.rel (0) target = $region29
  $region28: #{token_encoder.1} parent=0 // pred_region
    _
  $region29: #{token_encoder.1} parent=0 // pred_fallthru
    _
  // Predicated region
  $region30: #{token_encoder.1} parent=0 // pred_check
    _
  $region31: #{token_encoder.1} parent=0 // pred_check_branch
    %28 = sbr.rel (0) target = $region33
  $region32: #{token_encoder.1} parent=0 // pred_region
    _
  $region33: #{token_encoder.1} parent=0 // pred_fallthru
    _
  %v29 = vld [vmem:[%s0] sm:$0xf]
  %v30 = vld [vmem:[%s0 + $0x4] sm:$0xf]
  %v31 = vld [vmem:[%s1] sm:$0xf]
  %v32 = vld [vmem:[%s1 + $0x4] sm:$0xf]
  %v33 = vld [vmem:[%s1 + $0x8] sm:$0xf]
  %v34 = vld [vmem:[%s1 + $0xc] sm:$0xf]
  %v35 = vld [vmem:[%s1 + $0x10] sm:$0xf]
  %v36 = vld [vmem:[%s1 + $0x14] sm:$0xf]
  %v37 = vld [vmem:[%s1 + $0x18] sm:$0xf]
  %v38 = vld [vmem:[%s1 + $0x1c] sm:$0xf]
  %v39 = vld [vmem:[%s1 + $0x20] sm:$0xf]
  %v40 = vld [vmem:[%s1 + $0x24] sm:$0xf]
  %v41 = vld [vmem:[%s1 + $0x28] sm:$0xf]
  %v42 = vld [vmem:[%s1 + $0x2c] sm:$0xf]
  %v43 = vld [vmem:[%s1 + $0x30] sm:$0xf]
  %v44 = vld [vmem:[%s1 + $0x34] sm:$0xf]
  %v45 = vld [vmem:[%s1 + $0x38] sm:$0xf]
  %v46 = vld [vmem:[%s1 + $0x3c] sm:$0xf]
  %v47 = vld [vmem:[%s2] sm:$0x1]
  %v49 = vperm.slane %v47, 0
  %v53 = vunpack.c.l.b16 %v29
  %v54 = vunpack.c.l.b16 %v30
  %v55 = vpack.c.b16 %v54, %v53
  %v73 = vunpack.c.l.b16 %v31
  %v74 = vunpack.c.l.b16 %v32
  %v75 = vunpack.c.l.b16 %v33
  %v76 = vunpack.c.l.b16 %v34
  %v77 = vunpack.c.l.b16 %v35
  %v78 = vunpack.c.l.b16 %v36
  %v79 = vunpack.c.l.b16 %v37
  %v80 = vunpack.c.l.b16 %v38
  %v81 = vunpack.c.l.b16 %v39
  %v82 = vunpack.c.l.b16 %v40
  %v83 = vunpack.c.l.b16 %v41
  %v84 = vunpack.c.l.b16 %v42
  %v85 = vunpack.c.l.b16 %v43
  %v86 = vunpack.c.l.b16 %v44
  %v87 = vunpack.c.l.b16 %v45
  %v88 = vunpack.c.l.b16 %v46
  %v89 = vpack.c.b16 %v74, %v73
  %v90 = vpack.c.b16 %v76, %v75
  %v91 = vpack.c.b16 %v78, %v77
  %v92 = vpack.c.b16 %v80, %v79
  %v93 = vpack.c.b16 %v82, %v81
  %v94 = vpack.c.b16 %v84, %v83
  %v95 = vpack.c.b16 %v86, %v85
  %v96 = vpack.c.b16 %v88, %v87
  %105 = vmatpush.bf16.msra.mxu0 %v96
  %106 = vmatpush.bf16.msra.mxu0 %v95
  %107 = vmatpush.bf16.msra.mxu0 %v94
  %108 = vmatpush.bf16.msra.mxu0 %v93
  %109 = vmatpush.bf16.msra.mxu0 %v92
  %110 = vmatpush.bf16.msra.mxu0 %v91
  %111 = vmatpush.bf16.msra.mxu0 %v90
  %112 = vmatpush.bf16.msra.mxu0 %v89
  %113 = vmatmul.bf16.gmra.mxu0 %v55
  %v114 = vpop.f32.mrf.mxu0
  %v115 = vadd.f32 %v49, %v114
  %v116 = vpop.f32.mrf.mxu0
  %v117 = vadd.f32 %v49, %v116
  %118 = vdwg.mxu0
  %v119 = vmax.f32 %v115, 0.0
  %v120 = vmax.f32 %v117, 0.0
  %v121 = vpack.c.bf16 %v120, %v119
  %v122 = vld [vmem:[%s3] sm:$0xf]
  %v123 = vld [vmem:[%s3 + $0x4] sm:$0xf]
  %v124 = vld [vmem:[%s3 + $0x8] sm:$0xf]
  %v125 = vld [vmem:[%s3 + $0xc] sm:$0xf]
  %v126 = vld [vmem:[%s3 + $0x10] sm:$0xf]
  %v127 = vld [vmem:[%s3 + $0x14] sm:$0xf]
  %v128 = vld [vmem:[%s3 + $0x18] sm:$0xf]
  %v129 = vld [vmem:[%s3 + $0x1c] sm:$0xf]
  %v130 = vld [vmem:[%s3 + $0x20] sm:$0xf]
  %v131 = vld [vmem:[%s3 + $0x24] sm:$0xf]
  %v132 = vld [vmem:[%s3 + $0x28] sm:$0xf]
  %v133 = vld [vmem:[%s3 + $0x2c] sm:$0xf]
  %v134 = vld [vmem:[%s3 + $0x30] sm:$0xf]
  %v135 = vld [vmem:[%s3 + $0x34] sm:$0xf]
  %v136 = vld [vmem:[%s3 + $0x38] sm:$0xf]
  %v137 = vld [vmem:[%s3 + $0x3c] sm:$0xf]
  %v138 = vld [vmem:[%s4] sm:$0x1]
  %v140 = vperm.slane %v138, 0
  %v158 = vunpack.c.l.b16 %v122
  %v159 = vunpack.c.l.b16 %v123
  %v160 = vunpack.c.l.b16 %v124
  %v161 = vunpack.c.l.b16 %v125
  %v162 = vunpack.c.l.b16 %v126
  %v163 = vunpack.c.l.b16 %v127
  %v164 = vunpack.c.l.b16 %v128
  %v165 = vunpack.c.l.b16 %v129
  %v166 = vunpack.c.l.b16 %v130
  %v167 = vunpack.c.l.b16 %v131
  %v168 = vunpack.c.l.b16 %v132
  %v169 = vunpack.c.l.b16 %v133
  %v170 = vunpack.c.l.b16 %v134
  %v171 = vunpack.c.l.b16 %v135
  %v172 = vunpack.c.l.b16 %v136
  %v173 = vunpack.c.l.b16 %v137
  %v174 = vpack.c.b16 %v159, %v158
  %v175 = vpack.c.b16 %v161, %v160
  %v176 = vpack.c.b16 %v163, %v162
  %v177 = vpack.c.b16 %v165, %v164
  %v178 = vpack.c.b16 %v167, %v166
  %v179 = vpack.c.b16 %v169, %v168
  %v180 = vpack.c.b16 %v171, %v170
  %v181 = vpack.c.b16 %v173, %v172
  %190 = vmatpush.bf16.msra.mxu0 %v181
  %191 = vmatpush.bf16.msra.mxu0 %v180
  %192 = vmatpush.bf16.msra.mxu0 %v179
  %193 = vmatpush.bf16.msra.mxu0 %v178
  %194 = vmatpush.bf16.msra.mxu0 %v177
  %195 = vmatpush.bf16.msra.mxu0 %v176
  %196 = vmatpush.bf16.msra.mxu0 %v175
  %197 = vmatpush.bf16.msra.mxu0 %v174
  %198 = vmatmul.bf16.gmra.mxu0 %v121
  %v199 = vpop.f32.mrf.mxu0
  %v200 = vadd.f32 %v140, %v199
  %v201 = vpop.f32.mrf.mxu0
  %v202 = vadd.f32 %v140, %v201
  %203 = vdwg.mxu0
  %v204 = vld [vmem:[%s5] sm:$0x1]
  %v205 = vld [vmem:[%s6] sm:$0x1]
  %v206 = vld [vmem:[%s7] sm:$0x1]
  %207 = vadd.xlane.f32.xlu0 %v200
  %v208 = vpop.xlane.xlu0 %207
  %209 = vadd.xlane.f32.xlu0 %v202
  %v210 = vpop.xlane.xlu0 %209
  %v211 = vmul.f32 %v208, 0.03125
  %v212 = vmul.f32 %v210, 0.03125
  %v213 = vsub.f32 %v200, %v211
  %v214 = vsub.f32 %v202, %v212
  %v216 = vperm.slane %v206, 0
  %v218 = vmul.f32 %v213, %v216
  %v219 = vmul.f32 %v214, %v216
  %v220 = vmul.f32 %v218, %v218
  %v221 = vmul.f32 %v219, %v219
  %222 = vadd.xlane.f32.xlu0 %v220
  %v223 = vpop.xlane.xlu0 %222
  %224 = vadd.xlane.f32.xlu0 %v221
  %v225 = vpop.xlane.xlu0 %224
  %v226 = vmul.f32 %v223, 0.03125
  %v227 = vmul.f32 %v225, 0.03125
  %v228 = vadd.f32 %v226, 1e-05
  %v229 = vadd.f32 %v227, 1e-05
  %v230 = vrsqrt.pop %v228
  %v231 = vmul.f32 %v230, %v228
  %v232 = vmul.f32 %v231, %v230
  %v233 = vmul.f32 0.5, %v232
  %v234 = vsub.f32 1.5, %v233
  %v235 = vmul.f32 %v230, %v234
  %vm236 = vweird.f32 %v228
  %vm237 = vweird.f32 %v230
  %vm238 = vmor %vm236, %vm237
  %v239 = vsel %vm238, %v230, %v235
  %v240 = vrsqrt.pop %v229
  %v241 = vmul.f32 %v240, %v229
  %v242 = vmul.f32 %v241, %v240
  %v243 = vmul.f32 0.5, %v242
  %v244 = vsub.f32 1.5, %v243
  %v245 = vmul.f32 %v240, %v244
  %vm246 = vweird.f32 %v229
  %vm247 = vweird.f32 %v240
  %vm248 = vmor %vm246, %vm247
  %v249 = vsel %vm248, %v240, %v245
  %v250 = vmul.f32 %v218, %v239
  %v251 = vmul.f32 %v219, %v249
  %v253 = vperm.slane %v204, 0
  %v255 = vmul.f32 %v250, %v253
  %v256 = vmul.f32 %v251, %v253
  %v258 = vperm.slane %v205, 0
  %v260 = vadd.f32 %v255, %v258
  %v261 = vadd.f32 %v256, %v258
  %262 = vst [vmem:[%s8] sm:$0xff] %v260
  %263 = vst [vmem:[%s8 + $0x8] sm:$0xff] %v261
  // Predicated region
  $region34: #{token_encoder.1} parent=0 // pred_check
    _
  $region35: #{token_encoder.1} parent=0 // pred_check_branch
    %265 = sbr.rel (0) target = $region37
  $region36: #{token_encoder.1} parent=0 // pred_region
    _
  $region37: #{token_encoder.1} parent=0 // pred_fallthru
    _
  // Predicated region
  $region38: #{token_encoder.1} parent=0 // pred_check
    _
  $region39: #{token_encoder.1} parent=0 // pred_check_branch
    %267 = sbr.rel (0) target = $region41
  $region40: #{token_encoder.1} parent=0 // pred_region
    _
  $region41: #{token_encoder.1} parent=0 // pred_fallthru
    _

</llo_original>
